<compile_context>
chip_gen: v7x
topology: tpu7x:2x2x1
jax: 0.10.0
libtpu: 0.0.40
codegen_flags: <defaults>
</compile_context>

<pallas_src>
import jax
import jax.numpy as jnp
from jax.experimental import pallas as pl
from jax.experimental.pallas import tpu as pltpu


_LANE_CANDIDATES = (1024, 512, 256, 128)
_SPLIT_BYTES = 1 * 1024 * 1024     # force >= 2 grid steps above this input size
_RAGGED_GRAN = 4096                # 1-D block granularity (32 sublanes * 128 lanes)


def _target_block_bytes() -> int:
    """Per-generation block target; 4 buffers (2 in + 2 out) must fit the
    default scoped VMEM (16 MiB v5e, 32 MiB v6e/v7x)."""
    try:
        kind = jax.devices()[0].device_kind.lower()
    except Exception:
        kind = ""
    if "v6" in kind or "v7" in kind:
        return 4 * 1024 * 1024     # 32 MiB scoped VMEM default
    return 2 * 1024 * 1024         # v5e / unknown: 16 MiB scoped VMEM default


_TARGET_BLOCK_BYTES = _target_block_bytes()


def _round_up(x: int, m: int) -> int:
    return ((x + m - 1) // m) * m


def _make_cube_kernel(out_dtype, upcast: bool):
    def kernel(x_ref, o_ref):
        x = x_ref[...]
        if upcast:
            x = x.astype(jnp.float32)     # free: HBM-bound, VALU has huge slack
        o_ref[...] = (x * x * x).astype(out_dtype)   # torch.pow(t, 3)
    return kernel


def _cube_call(x, block_shape, index_map, grid, kernel, n, itemsize):
    return pl.pallas_call(
        kernel,
        out_shape=jax.ShapeDtypeStruct(x.shape, x.dtype),
        grid_spec=pltpu.PrefetchScalarGridSpec(
            num_scalar_prefetch=0,
            grid=grid,
            in_specs=[pl.BlockSpec(block_shape, index_map)],
            out_specs=pl.BlockSpec(block_shape, index_map),
        ),
        compiler_params=pltpu.CompilerParams(
            dimension_semantics=("parallel",),
        ),
        cost_estimate=pl.CostEstimate(
            flops=2 * n, transcendentals=0, bytes_accessed=2 * n * itemsize),
    )(x)


@jax.jit
def cube(t: jax.Array) -> jax.Array:
    """Elementwise t**3, matching torch.pow(t, 3) (shape & dtype preserved)."""
    orig_shape = t.shape
    dtype = t.dtype
    n = t.size
    if n == 0:
        return t

    itemsize = jnp.dtype(dtype).itemsize
    upcast = jnp.issubdtype(dtype, jnp.floating) and itemsize < 4
    kernel = _make_cube_kernel(dtype, upcast)
    flat = t.reshape(-1)

    if n % 128 == 0:
        # ---------- aligned path: lane-dense 2-D slab, zero padding ----------
        lane = next(c for c in _LANE_CANDIDATES if n % c == 0)
        rows = n // lane
        sublane_gran = 8 * max(1, 4 // itemsize)   # 8 f32 / 16 bf16 / 32 int8
        tile_rows_max = max(
            sublane_gran,
            (_TARGET_BLOCK_BYTES // (lane * itemsize))
            // sublane_gran * sublane_gran,
        )
        if rows <= tile_rows_max:
            if n * itemsize > _SPLIT_BYTES and rows >= 2 * sublane_gran:
                # Mid-size input: >= 2 grid steps so both v7x TensorCores get
                # work and consecutive in/out DMAs overlap (ragged tail of the
                # last block is masked by Pallas).
                tile_rows = _round_up(pl.cdiv(rows, 2), sublane_gran)
            else:
                tile_rows = rows   # single block == full array: no constraints
        else:
            num_blocks = pl.cdiv(rows, tile_rows_max)
            if num_blocks % 2:
                num_blocks += 1    # even split across v7x's two TensorCores
            tile_rows = max(sublane_gran,
                            _round_up(pl.cdiv(rows, num_blocks), sublane_gran))
        grid = (pl.cdiv(rows, tile_rows),)
        x2d = flat.reshape(rows, lane)
        out = _cube_call(x2d, (tile_rows, lane), lambda i: (i, 0), grid,
                         kernel, n, itemsize)
        return out.reshape(orig_shape)

    # ---------- ragged path: flat 1-D, no pad / slice HBM passes ----------
    blk_max = max(
        _RAGGED_GRAN,
        (min(_TARGET_BLOCK_BYTES, 2 * 1024 * 1024) // itemsize)
        // _RAGGED_GRAN * _RAGGED_GRAN,
    )
    if n <= blk_max:
        if n * itemsize > _SPLIT_BYTES and n >= 2 * _RAGGED_GRAN:
            num_blocks = 2         # keep both v7x cores / DMA overlap
        else:
            num_blocks = 1
    else:
        num_blocks = pl.cdiv(n, blk_max)
        if num_blocks % 2:
            num_blocks += 1
    if num_blocks == 1:
        block = n                  # full-array block: no (8,128) constraint
    else:
        block = max(_RAGGED_GRAN,
                    _round_up(pl.cdiv(n, num_blocks), _RAGGED_GRAN))
    grid = (pl.cdiv(n, block),)
    out = _cube_call(flat, (block,), lambda i: (i,), grid, kernel, n, itemsize)
    return out.reshape(orig_shape)


if __name__ == "__main__":
    key = jax.random.PRNGKey(0)
    k1, k2, k3, k4 = jax.random.split(key, 4)

    # Primary check: the module's NCHW activation shape (f32; fully aligned,
    # single full-slab block, no pad / slice passes).
    x = jax.random.normal(key, (2, 4, 16, 16), dtype=jnp.float32)
    out = jax.block_until_ready(cube(x))
    assert out.shape == x.shape
    assert out.dtype == x.dtype
    assert jnp.allclose(out, x ** 3, rtol=1e-6, atol=1e-6)

    # Small ragged element count: flat 1-D single-block path (no padding).
    y = jax.random.normal(k1, (3, 5, 7), dtype=jnp.float32)
    out_y = jax.block_until_ready(cube(y))
    assert jnp.allclose(out_y, y ** 3, rtol=1e-6, atol=1e-6)

    # Aligned multi-block grid path (>= 2 balanced tiles, masked partial
    # last block, parallel grid semantics).
    z = jax.random.normal(k2, (600, 1024), dtype=jnp.float32)
    out_z = jax.block_until_ready(cube(z))
    assert jnp.allclose(out_z, z ** 3, rtol=1e-6, atol=1e-6)

    # Larger ragged count: blocked 1-D grid with a masked partial last block
    # (no pad / slice HBM round-trips).
    r = jax.random.normal(k3, (701, 773), dtype=jnp.float32)
    out_r = jax.block_until_ready(cube(r))
    assert jnp.allclose(out_r, r ** 3, rtol=1e-6, atol=1e-6)

    # bf16 path (in-kernel f32 upcast, rounded once on store).
    w = jax.random.normal(k4, (2, 4, 16, 16), dtype=jnp.bfloat16)
    out_w = jax.block_until_ready(cube(w))
    ref_w = (w.astype(jnp.float32) ** 3).astype(jnp.bfloat16)
    assert out_w.dtype == jnp.bfloat16
    assert jnp.allclose(out_w.astype(jnp.float32), ref_w.astype(jnp.float32),
                        rtol=5e-2, atol=5e-2)

    print("KERNEL_OK")
</pallas_src>

<mosaic_0001>
module attributes {stable_mosaic.version = 11 : i64} {
  func.func @kernel(%arg0: i32, %arg1: memref<2x1024xf32, #tpu.memory_space<vmem>>, %arg2: memref<2x1024xf32, #tpu.memory_space<vmem>>) attributes {dimension_semantics = [#tpu.dimension_semantics<parallel>], iteration_bounds = array<i64: 1>, scalar_prefetch = 0 : i64, scratch_operands = 0 : i64, tpu.core_type = #tpu.core_type<tc>, window_params = [{transform_indices = @transform_0, window_bounds = array<i64: 2, 1024>}, {transform_indices = @transform_1, window_bounds = array<i64: 2, 1024>}]} {
    %c0 = arith.constant 0 : index
    %c0_0 = arith.constant 0 : index
    %0 = vector.load %arg1[%c0, %c0_0] : memref<2x1024xf32, #tpu.memory_space<vmem>>, vector<2x1024xf32>
    %1 = arith.mulf %0, %0 : vector<2x1024xf32>
    %2 = arith.mulf %1, %0 : vector<2x1024xf32>
    %c0_1 = arith.constant 0 : index
    %c0_2 = arith.constant 0 : index
    %3 = vector.load %arg2[%c0_1, %c0_2] : memref<2x1024xf32, #tpu.memory_space<vmem>>, vector<2x1024xf32>
    tpu.vector_store %arg2[%c0_1, %c0_2], %2 {strides = array<i32>} : memref<2x1024xf32, #tpu.memory_space<vmem>>, vector<2x1024xf32>,
    return
  }
  func.func @transform_0(%arg0: i32) -> (i32, i32) {
    %c0_i32 = arith.constant 0 : i32
    %c0_i32_0 = arith.constant 0 : i32
    return %arg0, %c0_i32 : i32, i32
  }
  func.func @transform_1(%arg0: i32) -> (i32, i32) {
    %c0_i32 = arith.constant 0 : i32
    %c0_i32_0 = arith.constant 0 : i32
    return %arg0, %c0_i32 : i32, i32
  }
}

</mosaic_0001>

<llo_original>
// kernel: cube.1
$region0: #{cube.1}
  #allocation0 [shape = 'u32[]', space=smem, size = 0x4, offset = 0x4, fixed_abs, tag = 'smem constant byte address 0x4 - core index']
  #allocation1 [shape = 'u32[144,128]{1,0:T(1,128)}', space=vmem, size = 0x12000, scoped, tag = 'internal scratch']
  %s0 = inlined_call_operand.vmem [shape: f32[2,1024], index: 0, kind: input, shape index: {}]
  %s1 = inlined_call_operand.vmem [shape: f32[2,1024], index: 1, kind: output, shape index: {}]
  %s2 = sld [smem:[#allocation0]]
  $region14: #{cube.1} parent=0
    _
  %s4 = ssub.s32 1, %s2
  %s5 = scalar_select 0, %s4, %s2
  // Predicated region
  $region2: #{cube.1} parent=0 // pred_check
    _
  $region3: #{cube.1} parent=0 // pred_check_branch
    %7 = sbr.rel (0) target = $region5
  $region4: #{cube.1} parent=0 // pred_region
    _
  $region5: #{cube.1} parent=0 // pred_fallthru
    _
  %v8 = vld [vmem:[%s0] sm:$0xff]
  %v9 = vld [vmem:[%s0 + $0x8] sm:$0xff]
  %v10 = vmul.f32 %v8, %v8
  %v11 = vmul.f32 %v9, %v9
  %v12 = vmul.f32 %v10, %v8
  %v13 = vmul.f32 %v11, %v9
  %14 = vst [vmem:[%s1] sm:$0xff] %v12
  %15 = vst [vmem:[%s1 + $0x8] sm:$0xff] %v13
  // Predicated region
  $region6: #{cube.1} parent=0 // pred_check
    _
  $region7: #{cube.1} parent=0 // pred_check_branch
    %17 = sbr.rel (0) target = $region9
  $region8: #{cube.1} parent=0 // pred_region
    _
  $region9: #{cube.1} parent=0 // pred_fallthru
    _
  // Predicated region
  $region10: #{cube.1} parent=0 // pred_check
    _
  $region11: #{cube.1} parent=0 // pred_check_branch
    %19 = sbr.rel (0) target = $region13
  $region12: #{cube.1} parent=0 // pred_region
    _
  $region13: #{cube.1} parent=0 // pred_fallthru
    _

</llo_original>
